<compile_context>
chip_gen: v7x
topology: tpu7x:2x2x1
jax: 0.10.0
libtpu: 0.0.40
codegen_flags: <defaults>
</compile_context>

<pallas_src>
import jax
import jax.numpy as jnp
from jax.experimental import pallas as pl
from jax.experimental.pallas import tpu as pltpu


LANE = 128


def _round_up(n, m):
    return -(-n // m) * m


def _pad2(a, rows, cols):
    return jnp.pad(a, ((0, rows - a.shape[0]), (0, cols - a.shape[1])))


def _pad1(v, n, value=0.0):
    return jnp.pad(v, (0, n - v.shape[0]), constant_values=value)


def fold_bn(gamma, beta, mean, var, eps=1e-5):
    scale = gamma / jnp.sqrt(var + eps)
    shift = beta - mean * scale
    return scale, shift


def _vmem_limit_bytes():
    # Size the scoped-VMEM limit against the actual chip (64 MiB on v7x, 128 MiB v5e/v6e).
    try:
        cap = int(pltpu.get_tpu_info().vmem_capacity_bytes)
    except Exception:
        cap = 64 * 1024 * 1024
    return int(min(max(cap - 8 * 1024 * 1024, 32 * 1024 * 1024), 100 * 1024 * 1024))


def pick_row_tiling(n, tm_max=512):
    """Pad node count tightly and pick a row-tile size.

    Returns (Np, tm) with tm | Np.  Padding is to a multiple of 8 (tiny graphs),
    2*tm with lane-aligned tm (medium), or 256 (large) -- never to the K tile,
    so N=700 pads to 768 rows instead of 1024.
    """
    n8 = _round_up(max(n, 8), 8)
    if n8 <= 128:
        return n8, n8                            # tiny graph: single row tile
    if n8 <= 2 * tm_max:
        tm = _round_up(-(-n8 // 2), 128)         # >= 2 lane-aligned row tiles so the
        return 2 * tm, tm                        # "parallel" axis uses both TCs on v7x
    Np = _round_up(n8, 256)
    for tm in (tm_max, tm_max // 2, 256, 128):
        if Np % tm == 0:
            return Np, tm
    return Np, 128


def plan_tiling(n, c_pad, mm_bytes, *, tm_max=512):
    """Return (Np, tm, tk).  tk is None => fully-resident-x single-pass kernel."""
    Np, tm = pick_row_tiling(n, tm_max)
    budget = int(0.6 * _vmem_limit_bytes())      # headroom: v7x only has 64 MiB VMEM
    w_bytes = 2 * c_pad * c_pad * mm_bytes + 4 * 4 * c_pad

    def resident_fp(tm_):
        return (2 * tm_ * Np * mm_bytes          # adjacency row panel, double-buffered
                + 2 * Np * c_pad * mm_bytes      # resident x (counted x2 conservatively)
                + 2 * tm_ * c_pad * 4            # output tile, double-buffered
                + 2 * tm_ * c_pad * 4            # f32 h/z intermediates
                + w_bytes)

    t = tm
    while t >= 64 and t % 8 == 0 and Np % t == 0:
        if resident_fp(t) <= budget:
            return Np, t, None
        t //= 2

    # Very large graphs only: K-tiled accumulation over adjacency column chunks.
    for tk in (2048, 1024, 512, 256, 128):
        if Np % tk == 0:
            fp = (2 * tm * tk * mm_bytes + 2 * tk * c_pad * mm_bytes
                  + tm * c_pad * 4 + 2 * tm * c_pad * 4 + w_bytes)
            if fp <= budget:
                return Np, tm, tk
    return Np, tm, (128 if Np % 128 == 0 else Np)


def gin_conv_kernel_resident(adj_ref, x_ref, w1_ref, b1_ref, w2_ref, b2_ref, o_ref):
    # GIN aggregation: (A + (1+eps)I) @ x over the full (resident) x; adj/x may be
    # bf16 (edge counts exact in bf16), accumulate in f32 on the MXU.
    h = jnp.dot(adj_ref[...], x_ref[...], preferred_element_type=jnp.float32)
    # Fused MLP: Linear -> ReLU -> Linear (both BatchNorms folded into W2/b2 outside).
    z = jnp.maximum(
        jnp.dot(h.astype(w1_ref.dtype), w1_ref[...],
                preferred_element_type=jnp.float32) + b1_ref[...], 0.0)
    o_ref[...] = (jnp.dot(z.astype(w2_ref.dtype), w2_ref[...],
                          preferred_element_type=jnp.float32)
                  + b2_ref[...]).astype(o_ref.dtype)


def gin_conv_kernel_ktiled(adj_ref, x_ref, w1_ref, b1_ref, w2_ref, b2_ref, o_ref,
                           acc_ref):
    k = pl.program_id(1)

    @pl.when(k == 0)
    def _():
        acc_ref[...] = jnp.zeros_like(acc_ref)

    acc_ref[...] += jnp.dot(adj_ref[...], x_ref[...],
                            preferred_element_type=jnp.float32)

    @pl.when(k == pl.num_programs(1) - 1)
    def _():
        h = acc_ref[...]
        z = jnp.maximum(
            jnp.dot(h.astype(w1_ref.dtype), w1_ref[...],
                    preferred_element_type=jnp.float32) + b1_ref[...], 0.0)
        o_ref[...] = (jnp.dot(z.astype(w2_ref.dtype), w2_ref[...],
                              preferred_element_type=jnp.float32)
                      + b2_ref[...]).astype(o_ref.dtype)


def gin_conv_pallas(adj_p, x_p, w1, b1, w2, b2, *, tm, tk, out_dtype):
    Np, C = x_p.shape
    H = w1.shape[1]
    Co = w2.shape[1]
    out_b = jnp.dtype(out_dtype).itemsize
    flops = 2 * Np * Np * C + 2 * Np * C * H + 2 * Np * H * Co
    wbytes = (w1.size * w1.dtype.itemsize + w2.size * w2.dtype.itemsize
              + 4 * (b1.size + b2.size))
    vmem_limit = _vmem_limit_bytes()

    if tk is None:
        # Resident-x path: x DMA'd once (constant index_map), no accumulator scratch.
        assert Np % tm == 0
        bytes_accessed = (Np * Np * adj_p.dtype.itemsize
                          + Np * C * x_p.dtype.itemsize
                          + wbytes + Np * Co * out_b)
        full = lambda i: (0, 0)
        return pl.pallas_call(
            gin_conv_kernel_resident,
            out_shape=jax.ShapeDtypeStruct((Np, Co), out_dtype),
            grid_spec=pltpu.PrefetchScalarGridSpec(
                num_scalar_prefetch=0,
                grid=(Np // tm,),
                in_specs=[
                    pl.BlockSpec((tm, Np), lambda i: (i, 0)),  # adjacency row panel
                    pl.BlockSpec((Np, C), full),               # x, fully VMEM-resident
                    pl.BlockSpec((C, H), full),                # w1 (resident)
                    pl.BlockSpec((1, H), full),                # b1 (f32)
                    pl.BlockSpec((H, Co), full),               # w2 (BN-folded, resident)
                    pl.BlockSpec((1, Co), full),               # b2 (BN-folded, f32)
                ],
                out_specs=pl.BlockSpec((tm, Co), lambda i: (i, 0)),
            ),
            compiler_params=pltpu.CompilerParams(
                dimension_semantics=("parallel",),
                vmem_limit_bytes=vmem_limit,
            ),
            cost_estimate=pl.CostEstimate(flops=int(flops), transcendentals=0,
                                          bytes_accessed=int(bytes_accessed)),
        )(adj_p, x_p, w1, b1, w2, b2)

    # K-tiled fallback path (very large graphs): accumulate over column chunks.
    # NOTE: pipeline_mode=pl.Buffered(3) on the adjacency spec is a cheap follow-up
    # experiment if a profile shows exposed DMA at row-tile boundaries.
    assert Np % tm == 0 and Np % tk == 0
    row_tiles = Np // tm
    bytes_accessed = (Np * Np * adj_p.dtype.itemsize
                      + row_tiles * Np * C * x_p.dtype.itemsize  # x re-streamed per row tile
                      + wbytes + Np * Co * out_b)
    full2 = lambda i, k: (0, 0)
    return pl.pallas_call(
        gin_conv_kernel_ktiled,
        out_shape=jax.ShapeDtypeStruct((Np, Co), out_dtype),
        grid_spec=pltpu.PrefetchScalarGridSpec(
            num_scalar_prefetch=0,
            grid=(row_tiles, Np // tk),
            in_specs=[
                pl.BlockSpec((tm, tk), lambda i, k: (i, k)),   # adjacency panel
                pl.BlockSpec((tk, C), lambda i, k: (k, 0)),    # x K-chunk
                pl.BlockSpec((C, H), full2),
                pl.BlockSpec((1, H), full2),
                pl.BlockSpec((H, Co), full2),
                pl.BlockSpec((1, Co), full2),
            ],
            out_specs=pl.BlockSpec((tm, Co), lambda i, k: (i, 0)),
            scratch_shapes=[pltpu.VMEM((tm, C), jnp.float32)],
        ),
        compiler_params=pltpu.CompilerParams(
            dimension_semantics=("parallel", "arbitrary"),
            vmem_limit_bytes=vmem_limit,
        ),
        cost_estimate=pl.CostEstimate(flops=int(flops), transcendentals=0,
                                      bytes_accessed=int(bytes_accessed)),
    )(adj_p, x_p, w1, b1, w2, b2)


def gin_forward_pallas(adj, x, layers, outer_bns, *, matmul_dtype=jnp.float32,
                       tm_max=512):
    """Pallas forward: adj is dense (N,N) with adj[t,s]=#edges s->t."""
    N, c_in = x.shape
    eps = 0.0  # PyG GINConv default (train_eps=False)
    mm_bytes = jnp.dtype(matmul_dtype).itemsize
    n_layers = len(layers)

    # Fold BOTH BatchNorms into (W2, b2) and pad channel dims to 128 lanes so every
    # block / store is lane-dense. Padded weight rows/cols and biases are zero.
    prepped = []
    for i, p in enumerate(layers):
        s1, t1 = fold_bn(p["bn_gamma"], p["bn_beta"], p["bn_mean"], p["bn_var"])
        w2 = p["w2"] * s1[:, None]          # post-ReLU BN folded into W2 (exact)
        b2 = p["b2"] + t1 @ p["w2"]
        if i < n_layers - 1:                # inter-layer BN folded into this layer's output
            so, to = fold_bn(*outer_bns[i])
            w2 = w2 * so[None, :]
            b2 = b2 * so + to
        ci, h = p["w1"].shape
        co = w2.shape[1]
        cip, hp, cop = _round_up(ci, LANE), _round_up(h, LANE), _round_up(co, LANE)
        # Intermediate layers emit matmul_dtype directly (no wrapper-side cast pass);
        # the final layer always emits f32.
        out_dtype = jnp.float32 if i == n_layers - 1 else matmul_dtype
        prepped.append(dict(
            w1=_pad2(p["w1"], cip, hp).astype(matmul_dtype),
            b1=_pad1(p["b1"], hp).reshape(1, -1),
            w2=_pad2(w2, hp, cop).astype(matmul_dtype),
            b2=_pad1(b2, cop).reshape(1, -1),
            c_out=co, out_dtype=out_dtype,
        ))

    c_pad_max = max([_round_up(c_in, LANE)]
                    + [pp["w1"].shape[1] for pp in prepped]
                    + [pp["w2"].shape[1] for pp in prepped])
    Np, tm, tk = plan_tiling(N, c_pad_max, mm_bytes, tm_max=tm_max)

    # Fold the GIN self-loop term (1+eps)*x into the adjacency (shared by all layers).
    # NOTE: padded adjacency rows/cols are ZERO; padded OUTPUT node rows may pick up
    # nonzero bias values in the epilogue, but the zero padded adjacency columns
    # guarantee they never contaminate real rows in the next layer's aggregation.
    adj_i = adj + (1.0 + eps) * jnp.eye(N, dtype=adj.dtype)
    adj_p = _pad2(adj_i, Np, Np).astype(matmul_dtype)

    xp = _pad2(x, Np, _round_up(c_in, LANE)).astype(matmul_dtype)
    for pp in prepped:
        xp = gin_conv_pallas(adj_p, xp, pp["w1"], pp["b1"], pp["w2"], pp["b2"],
                             tm=tm, tk=tk, out_dtype=pp["out_dtype"])
    return xp[:N, :prepped[-1]["c_out"]]


def gin_forward_ref(adj, x, layers, outer_bns):
    # pure-JAX f32 reference with the module's exact (unfolded) semantics
    for i, p in enumerate(layers):
        if i != 0:
            s, t = fold_bn(*outer_bns[i - 1])
            x = x * s[None, :] + t[None, :]
        h = x + adj @ x
        z = jnp.maximum(h @ p["w1"] + p["b1"][None, :], 0.0)
        s1, t1 = fold_bn(p["bn_gamma"], p["bn_beta"], p["bn_mean"], p["bn_var"])
        z = z * s1[None, :] + t1[None, :]
        x = z @ p["w2"] + p["b2"][None, :]
    return x


def make_layer_params(key, c_in, c_hid, c_out):
    ks = jax.random.split(key, 8)
    return {
        "w1": jax.random.normal(ks[0], (c_in, c_hid), jnp.float32) * 0.1,
        "b1": jax.random.normal(ks[1], (c_hid,), jnp.float32) * 0.05,
        "bn_gamma": 1.0 + 0.1 * jax.random.normal(ks[2], (c_hid,), jnp.float32),
        "bn_beta": 0.05 * jax.random.normal(ks[3], (c_hid,), jnp.float32),
        "bn_mean": 0.1 * jax.random.normal(ks[4], (c_hid,), jnp.float32),
        "bn_var": 1.0 + 0.1 * jnp.abs(jax.random.normal(ks[5], (c_hid,), jnp.float32)),
        "w2": jax.random.normal(ks[6], (c_hid, c_out), jnp.float32) * 0.1,
        "b2": jax.random.normal(ks[7], (c_out,), jnp.float32) * 0.05,
    }


def build_case(key, N, E, in_c, hid_c, out_c, n_layers):
    k_x, k_src, k_dst, k_p = jax.random.split(key, 4)
    x = jax.random.normal(k_x, (N, in_c), jnp.float32)
    # edge_index -> dense adjacency A[t, s] = #edges s->t
    src = jax.random.randint(k_src, (E,), 0, N)
    dst = jax.random.randint(k_dst, (E,), 0, N)
    adj = jnp.zeros((N, N), jnp.float32).at[dst, src].add(1.0)
    dims = ([(in_c, hid_c, hid_c)] + [(hid_c, hid_c, hid_c)] * (n_layers - 2)
            + [(hid_c, hid_c, out_c)])
    pkeys = jax.random.split(k_p, n_layers + (n_layers - 1))
    layers = [make_layer_params(pkeys[i], *dims[i]) for i in range(n_layers)]
    # outer BatchNorm1d(hidden) applied before layers 1..n-1 (eval mode)
    outer_bns = []
    for j in range(n_layers - 1):
        bk = jax.random.split(pkeys[n_layers + j], 4)
        outer_bns.append((
            1.0 + 0.1 * jax.random.normal(bk[0], (hid_c,), jnp.float32),      # gamma
            0.05 * jax.random.normal(bk[1], (hid_c,), jnp.float32),           # beta
            0.1 * jax.random.normal(bk[2], (hid_c,), jnp.float32),            # running_mean
            1.0 + 0.1 * jnp.abs(jax.random.normal(bk[3], (hid_c,), jnp.float32)),  # running_var
        ))
    return adj, x, layers, outer_bns


if __name__ == "__main__":
    key = jax.random.PRNGKey(0)
    k1, k2 = jax.random.split(key)

    # Case 1: tiny graph (single resident block), f32 path, tight tolerance.
    adj, x, layers, obns = build_case(k1, N=16, E=48, in_c=8, hid_c=32, out_c=16, n_layers=3)
    out = jax.block_until_ready(gin_forward_pallas(adj, x, layers, obns))
    ref = gin_forward_ref(adj, x, layers, obns)
    assert out.shape == ref.shape == (16, 16), out.shape
    assert jnp.allclose(out, ref, atol=1e-4, rtol=1e-4), float(jnp.max(jnp.abs(out - ref)))

    # Case 2: larger graph -> pads to 768 rows, 2 row tiles (both TCs on v7x),
    # resident-x path (no K axis, no x re-streaming).
    adj, x, layers, obns = build_case(k2, N=700, E=3000, in_c=8, hid_c=32, out_c=16, n_layers=3)
    ref = gin_forward_ref(adj, x, layers, obns)

    out_f32 = jax.block_until_ready(gin_forward_pallas(adj, x, layers, obns))
    assert out_f32.shape == (700, 16), out_f32.shape
    assert jnp.allclose(out_f32, ref, atol=1e-4, rtol=1e-4), \
        float(jnp.max(jnp.abs(out_f32 - ref)))

    # Full bf16 path: adjacency + weights + intermediate activations in bf16
    # (f32 MXU accumulation / f32 bias adds), bf16 stores between layers.
    out_bf16 = jax.block_until_ready(
        gin_forward_pallas(adj, x, layers, obns, matmul_dtype=jnp.bfloat16))
    max_err = float(jnp.max(jnp.abs(out_bf16 - ref)))
    assert max_err < 5e-2 * max(1.0, float(jnp.max(jnp.abs(ref)))), max_err

    print("KERNEL_OK")
</pallas_src>

<mosaic_0001>
module attributes {stable_mosaic.version = 11 : i64} {
  func.func @gin_conv_kernel_ktiled(%arg0: i32, %arg1: i32, %arg2: memref<16x16xf32, #tpu.memory_space<vmem>>, %arg3: memref<16x128xf32, #tpu.memory_space<vmem>>, %arg4: memref<128x128xf32, #tpu.memory_space<vmem>>, %arg5: memref<1x128xf32, #tpu.memory_space<vmem>>, %arg6: memref<128x128xf32, #tpu.memory_space<vmem>>, %arg7: memref<1x128xf32, #tpu.memory_space<vmem>>, %arg8: memref<16x128xf32, #tpu.memory_space<vmem>>, %arg9: memref<16x128xf32, #tpu.memory_space<vmem>>) attributes {dimension_semantics = [#tpu.dimension_semantics<parallel>, #tpu.dimension_semantics<arbitrary>], iteration_bounds = array<i64: 1, 1>, scalar_prefetch = 0 : i64, scratch_operands = 1 : i64, tpu.core_type = #tpu.core_type<tc>, window_params = [{transform_indices = @transform_0, window_bounds = array<i64: 16, 16>}, {transform_indices = @transform_1, window_bounds = array<i64: 16, 128>}, {pipeline_mode = #tpu.pipeline_mode<synchronous>, transform_indices = @transform_2, window_bounds = array<i64: 128, 128>}, {pipeline_mode = #tpu.pipeline_mode<synchronous>, transform_indices = @transform_3, window_bounds = array<i64: 1, 128>}, {pipeline_mode = #tpu.pipeline_mode<synchronous>, transform_indices = @transform_4, window_bounds = array<i64: 128, 128>}, {pipeline_mode = #tpu.pipeline_mode<synchronous>, transform_indices = @transform_5, window_bounds = array<i64: 1, 128>}, {transform_indices = @transform_6, window_bounds = array<i64: 16, 128>}]} {
    %c0_i32 = arith.constant 0 : i32
    %0 = arith.cmpi eq, %arg1, %c0_i32 : i32
    %1 = arith.extui %0 : i1 to i32
    %c0_i32_0 = arith.constant 0 : i32
    %2 = arith.cmpi ne, %1, %c0_i32_0 : i32
    scf.if %2 {
      %cst_10 = arith.constant 0.000000e+00 : f32
      %12 = vector.broadcast %cst_10 : f32 to vector<16x128xf32>
      %c0_11 = arith.constant 0 : index
      %c0_12 = arith.constant 0 : index
      %13 = vector.load %arg9[%c0_11, %c0_12] : memref<16x128xf32, #tpu.memory_space<vmem>>, vector<16x128xf32>
      tpu.vector_store %arg9[%c0_11, %c0_12], %12 {strides = array<i32>} : memref<16x128xf32, #tpu.memory_space<vmem>>, vector<16x128xf32>,
    } else {
    }
    %c0 = arith.constant 0 : index
    %c0_1 = arith.constant 0 : index
    %3 = vector.load %arg9[%c0, %c0_1] : memref<16x128xf32, #tpu.memory_space<vmem>>, vector<16x128xf32>
    %c0_2 = arith.constant 0 : index
    %c0_3 = arith.constant 0 : index
    %4 = vector.load %arg2[%c0_2, %c0_3] : memref<16x16xf32, #tpu.memory_space<vmem>>, vector<16x16xf32>
    %c0_4 = arith.constant 0 : index
    %c0_5 = arith.constant 0 : index
    %5 = vector.load %arg3[%c0_4, %c0_5] : memref<16x128xf32, #tpu.memory_space<vmem>>, vector<16x128xf32>
    %cst = arith.constant dense<0.000000e+00> : vector<16x128xf32>
    %6 = tpu.matmul %4, %5, %cst {dimension_numbers = #tpu.dot_dimension_numbers<[1], [0], [0], [1], [0, 0, 1, 1], [], []>} : vector<16x16xf32>, vector<16x128xf32>, vector<16x128xf32> -> vector<16x128xf32>
    %7 = arith.addf %3, %6 : vector<16x128xf32>
    %c0_6 = arith.constant 0 : index
    %c0_7 = arith.constant 0 : index
    %8 = vector.load %arg9[%c0_6, %c0_7] : memref<16x128xf32, #tpu.memory_space<vmem>>, vector<16x128xf32>
    tpu.vector_store %arg9[%c0_6, %c0_7], %7 {strides = array<i32>} : memref<16x128xf32, #tpu.memory_space<vmem>>, vector<16x128xf32>,
    %c0_i32_8 = arith.constant 0 : i32
    %9 = arith.cmpi eq, %arg1, %c0_i32_8 : i32
    %10 = arith.extui %9 : i1 to i32
    %c0_i32_9 = arith.constant 0 : i32
    %11 = arith.cmpi ne, %10, %c0_i32_9 : i32
    scf.if %11 {
      %c0_10 = arith.constant 0 : index
      %c0_11 = arith.constant 0 : index
      %12 = vector.load %arg9[%c0_10, %c0_11] : memref<16x128xf32, #tpu.memory_space<vmem>>, vector<16x128xf32>
      %c0_12 = arith.constant 0 : index
      %c0_13 = arith.constant 0 : index
      %13 = vector.load %arg4[%c0_12, %c0_13] : memref<128x128xf32, #tpu.memory_space<vmem>>, vector<128x128xf32>
      %cst_14 = arith.constant dense<0.000000e+00> : vector<16x128xf32>
      %14 = tpu.matmul %12, %13, %cst_14 {dimension_numbers = #tpu.dot_dimension_numbers<[1], [0], [0], [1], [0, 0, 1, 1], [], []>} : vector<16x128xf32>, vector<128x128xf32>, vector<16x128xf32> -> vector<16x128xf32>
      %c0_15 = arith.constant 0 : index
      %c0_16 = arith.constant 0 : index
      %15 = vector.load %arg5[%c0_15, %c0_16] : memref<1x128xf32, #tpu.memory_space<vmem>>, vector<1x128xf32>
      %16 = vector.broadcast %15 : vector<1x128xf32> to vector<16x128xf32>
      %17 = arith.addf %14, %16 : vector<16x128xf32>
      %cst_17 = arith.constant 0.000000e+00 : f32
      %18 = vector.broadcast %cst_17 : f32 to vector<16x128xf32>
      %19 = arith.maximumf %17, %18 : vector<16x128xf32>
      %c0_18 = arith.constant 0 : index
      %c0_19 = arith.constant 0 : index
      %20 = vector.load %arg6[%c0_18, %c0_19] : memref<128x128xf32, #tpu.memory_space<vmem>>, vector<128x128xf32>
      %cst_20 = arith.constant dense<0.000000e+00> : vector<16x128xf32>
      %21 = tpu.matmul %19, %20, %cst_20 {dimension_numbers = #tpu.dot_dimension_numbers<[1], [0], [0], [1], [0, 0, 1, 1], [], []>} : vector<16x128xf32>, vector<128x128xf32>, vector<16x128xf32> -> vector<16x128xf32>
      %c0_21 = arith.constant 0 : index
      %c0_22 = arith.constant 0 : index
      %22 = vector.load %arg7[%c0_21, %c0_22] : memref<1x128xf32, #tpu.memory_space<vmem>>, vector<1x128xf32>
      %23 = vector.broadcast %22 : vector<1x128xf32> to vector<16x128xf32>
      %24 = arith.addf %21, %23 : vector<16x128xf32>
      %c0_23 = arith.constant 0 : index
      %c0_24 = arith.constant 0 : index
      %25 = vector.load %arg8[%c0_23, %c0_24] : memref<16x128xf32, #tpu.memory_space<vmem>>, vector<16x128xf32>
      tpu.vector_store %arg8[%c0_23, %c0_24], %24 {strides = array<i32>} : memref<16x128xf32, #tpu.memory_space<vmem>>, vector<16x128xf32>,
    } else {
    }
    return
  }
  func.func @transform_0(%arg0: i32, %arg1: i32) -> (i32, i32) {
    %c0_i32 = arith.constant 0 : i32
    return %arg0, %arg1 : i32, i32
  }
  func.func @transform_1(%arg0: i32, %arg1: i32) -> (i32, i32) {
    %c0_i32 = arith.constant 0 : i32
    %c0_i32_0 = arith.constant 0 : i32
    return %arg1, %c0_i32 : i32, i32
  }
  func.func @transform_2(%arg0: i32, %arg1: i32) -> (i32, i32) {
    %c0_i32 = arith.constant 0 : i32
    %c0_i32_0 = arith.constant 0 : i32
    %c0_i32_1 = arith.constant 0 : i32
    return %c0_i32, %c0_i32_0 : i32, i32
  }
  func.func @transform_3(%arg0: i32, %arg1: i32) -> (i32, i32) {
    %c0_i32 = arith.constant 0 : i32
    %c0_i32_0 = arith.constant 0 : i32
    %c0_i32_1 = arith.constant 0 : i32
    return %c0_i32, %c0_i32_0 : i32, i32
  }
  func.func @transform_4(%arg0: i32, %arg1: i32) -> (i32, i32) {
    %c0_i32 = arith.constant 0 : i32
    %c0_i32_0 = arith.constant 0 : i32
    %c0_i32_1 = arith.constant 0 : i32
    return %c0_i32, %c0_i32_0 : i32, i32
  }
  func.func @transform_5(%arg0: i32, %arg1: i32) -> (i32, i32) {
    %c0_i32 = arith.constant 0 : i32
    %c0_i32_0 = arith.constant 0 : i32
    %c0_i32_1 = arith.constant 0 : i32
    return %c0_i32, %c0_i32_0 : i32, i32
  }
  func.func @transform_6(%arg0: i32, %arg1: i32) -> (i32, i32) {
    %c0_i32 = arith.constant 0 : i32
    %c0_i32_0 = arith.constant 0 : i32
    return %arg0, %c0_i32 : i32, i32
  }
}

</mosaic_0001>

<llo_original>
// kernel: tpu_custom_call.1
$region0: #{tpu_custom_call.1}
  #allocation0 [shape = 'u32[]', space=smem, size = 0x4, offset = 0x4, fixed_abs, tag = 'smem constant byte address 0x4 - core index']
  #allocation1 [shape = 'u32[144,128]{1,0:T(1,128)}', space=vmem, size = 0x12000, scoped, tag = 'internal scratch']
  #allocation2 [shape = 'f32[16,128]{1,0:T(8,128)}', space=vmem, size = 0x2000, scoped, tag = 'scratch operand']
  %s0 = inlined_call_operand.hbm [shape: f32[16,16], index: 0, kind: input, shape index: {}]
  %s1 = inlined_call_operand.hbm [shape: f32[16,128], index: 1, kind: input, shape index: {}]
  %s2 = inlined_call_operand.hbm [shape: f32[128,128], index: 2, kind: input, shape index: {}]
  %s3 = inlined_call_operand.vmem [shape: f32[1,128], index: 3, kind: input, shape index: {}]
  %s4 = inlined_call_operand.hbm [shape: f32[128,128], index: 4, kind: input, shape index: {}]
  %s5 = inlined_call_operand.vmem [shape: f32[1,128], index: 5, kind: input, shape index: {}]
  %s6 = inlined_call_operand.hbm [shape: f32[16,128], index: 6, kind: output, shape index: {}]
  %s7 = sld [smem:[#allocation0]]
  $region58: #{tpu_custom_call.1} parent=0
    _
  %s9 = ssub.s32 1, %s7
  %s10 = scalar_select 0, %s9, %s7
  $region1: #{tpu_custom_call.1} parent=0
    #allocation3 [shape = 'u8[8192]{0}', space=vmem, size = 0x2000, scoped, tag = 'input window, operand 0, single buffered']
    #allocation4 [shape = 's32[1]{0}', space=sflag, size = 0x4, scoped, tag = 'scoped memory for tpu_custom_call.1']
    #allocation5 [shape = 's32[1]{0}', space=sflag, size = 0x4, scoped, tag = 'scoped memory for tpu_custom_call.1']
    #allocation6 [shape = 'u8[8192]{0}', space=vmem, size = 0x2000, scoped, tag = 'input window, operand 1, single buffered']
    #allocation7 [shape = 's32[1]{0}', space=sflag, size = 0x4, scoped, tag = 'scoped memory for tpu_custom_call.1']
    #allocation8 [shape = 'u8[65536]{0}', space=vmem, size = 0x10000, scoped, tag = 'input window, operand 2, single buffered']
    #allocation9 [shape = 'u8[65536]{0}', space=vmem, size = 0x10000, scoped, tag = 'input window, operand 4, single buffered']
    #allocation10 [shape = 's32[1]{0}', space=sflag, size = 0x4, scoped, tag = 'scoped memory for tpu_custom_call.1']
    #allocation11 [shape = 'u8[8192]{0}', space=vmem, size = 0x2000, scoped, tag = 'output window, operand 0, single buffered']
    %11 = vsyncpa [#allocation4], 0
    %12 = vsyncpa [#allocation7], 0
    %13 = vsyncpa [#allocation10], 0
    %14 = vsyncpa [#allocation5], 0
    // Predicated region
    $region2: #{tpu_custom_call.1} parent=1 // pred_check
      _
    $region3: #{tpu_custom_call.1} parent=1 // pred_check_branch
      %16 = sbr.rel (0) target = $region5
    $region4: #{tpu_custom_call.1} parent=1 // pred_region
      %s18 = ssub.s32 256, 256
      %19 = vsyncadd [#allocation4], %s18
      %s20 = sshll.u32 [#allocation3], 4
      %s21 = int_to_ptr.vmem [resolvable:$true] %s20
      %26 = dma.hbm_to_vmem [thread:$0]  %s0, 256, %s21, [#allocation4], 128, 128, 8
    $region5: #{tpu_custom_call.1} parent=1 // pred_fallthru
      _
    // Predicated region
    $region6: #{tpu_custom_call.1} parent=1 // pred_check
      _
    $region7: #{tpu_custom_call.1} parent=1 // pred_check_branch
      %28 = sbr.rel (0) target = $region9
    $region8: #{tpu_custom_call.1} parent=1 // pred_region
      %s30 = ssub.s32 256, 256
      %31 = vsyncadd [#allocation7], %s30
      %s32 = sshll.u32 [#allocation6], 4
      %s33 = int_to_ptr.vmem [resolvable:$true] %s32
      %38 = dma.hbm_to_vmem [thread:$0]  %s1, 256, %s33, [#allocation7], 128, 128, 8
    $region9: #{tpu_custom_call.1} parent=1 // pred_fallthru
      _
    // Predicated region
    $region10: #{tpu_custom_call.1} parent=1 // pred_check
      _
    $region11: #{tpu_custom_call.1} parent=1 // pred_check_branch
      %40 = sbr.rel (0) target = $region13
    $region12: #{tpu_custom_call.1} parent=1 // pred_region
      %s42 = ssub.s32 2048, 2048
      %43 = vsyncadd [#allocation7], %s42
      %s44 = sshll.u32 [#allocation8], 4
      %s45 = int_to_ptr.vmem [resolvable:$true] %s44
      %50 = dma.hbm_to_vmem [thread:$0]  %s2, 2048, %s45, [#allocation7], 128, 128, 8
    $region13: #{tpu_custom_call.1} parent=1 // pred_fallthru
      _
    // Predicated region
    $region14: #{tpu_custom_call.1} parent=1 // pred_check
      _
    $region15: #{tpu_custom_call.1} parent=1 // pred_check_branch
      %52 = sbr.rel (0) target = $region17
    $region16: #{tpu_custom_call.1} parent=1 // pred_region
      _
    $region17: #{tpu_custom_call.1} parent=1 // pred_fallthru
      _
    // Predicated region
    $region18: #{tpu_custom_call.1} parent=1 // pred_check
      _
    $region19: #{tpu_custom_call.1} parent=1 // pred_check_branch
      %54 = sbr.rel (0) target = $region21
    $region20: #{tpu_custom_call.1} parent=1 // pred_region
      %s56 = ssub.s32 2048, 2048
      %57 = vsyncadd [#allocation10], %s56
      %s58 = sshll.u32 [#allocation9], 4
      %s59 = int_to_ptr.vmem [resolvable:$true] %s58
      %64 = dma.hbm_to_vmem [thread:$0]  %s4, 2048, %s59, [#allocation10], 128, 128, 8
    $region21: #{tpu_custom_call.1} parent=1 // pred_fallthru
      _
    // Predicated region
    $region22: #{tpu_custom_call.1} parent=1 // pred_check
      _
    $region23: #{tpu_custom_call.1} parent=1 // pred_check_branch
      %66 = sbr.rel (0) target = $region25
    $region24: #{tpu_custom_call.1} parent=1 // pred_region
      _
    $region25: #{tpu_custom_call.1} parent=1 // pred_fallthru
      _
    // Predicated region
    $region26: #{tpu_custom_call.1} parent=1 // pred_check
      _
    $region27: #{tpu_custom_call.1} parent=1 // pred_check_branch
      %68 = sbr.rel (0) target = $region29
    $region28: #{tpu_custom_call.1} parent=1 // pred_region
      %69 = dma.done [#allocation4], 256
    $region29: #{tpu_custom_call.1} parent=1 // pred_fallthru
      _
    // Predicated region
    $region30: #{tpu_custom_call.1} parent=1 // pred_check
      _
    $region31: #{tpu_custom_call.1} parent=1 // pred_check_branch
      %71 = sbr.rel (0) target = $region33
    $region32: #{tpu_custom_call.1} parent=1 // pred_region
      %72 = dma.done [#allocation7], 256
    $region33: #{tpu_custom_call.1} parent=1 // pred_fallthru
      _
    // Predicated region
    $region34: #{tpu_custom_call.1} parent=1 // pred_check
      _
    $region35: #{tpu_custom_call.1} parent=1 // pred_check_branch
      %74 = sbr.rel (0) target = $region37
    $region36: #{tpu_custom_call.1} parent=1 // pred_region
      %75 = dma.done [#allocation7], 2048
    $region37: #{tpu_custom_call.1} parent=1 // pred_fallthru
      _
    // Predicated region
    $region38: #{tpu_custom_call.1} parent=1 // pred_check
      _
    $region39: #{tpu_custom_call.1} parent=1 // pred_check_branch
      %77 = sbr.rel (0) target = $region41
    $region40: #{tpu_custom_call.1} parent=1 // pred_region
      %78 = dma.done [#allocation10], 2048
    $region41: #{tpu_custom_call.1} parent=1 // pred_fallthru
      _
    %p79 = scmp.eq.s32.totalorder 0, 0
    // Predicated region
    $region42: #{tpu_custom_call.1} parent=1 // pred_check
      %p80 = pneg %p79
    $region43: #{tpu_custom_call.1} parent=1 // pred_check_branch
      %82 = sbr.rel (%p80) target = $region45
    $region44: #{tpu_custom_call.1} parent=1 // pred_region
      %83 = vst [vmem:[#allocation2] sm:$0xff] 0.0
      %84 = vst [vmem:[#allocation2 + $0x8] sm:$0xff] 0.0
    $region45: #{tpu_custom_call.1} parent=1 // pred_fallthru
      _
    %v85 = vld [vmem:[#allocation2] sm:$0xff]
    %v86 = vld [vmem:[#allocation2 + $0x8] sm:$0xff]
    %v87 = vld [vmem:[#allocation3] sm:$0xff]
    %v88 = vld [vmem:[#allocation3 + $0x8] sm:$0xff]
    %v89 = vld [vmem:[#allocation6] sm:$0xff]
    %v90 = vld [vmem:[#allocation6 + $0x8] sm:$0xff]
    %vm91 = vcmask 130048
    %v93 = vsel %vm91, %v87, 0
    %v96 = vsel %vm91, %v88, 0
    %98 = vmatprep.subr.mxu0 0.0
    %99 = vmatpush1.msra.mxu0 %v89
    %100 = vmatprep.subr.mxu0 0.0
    %101 = vmatpush1.msra.mxu0 %v90
    %102 = vmatprep.subr.mxu0 0.0
    %103 = vmatpush1.msra.mxu0 0.0
    %104 = vmatprep.subr.mxu0 0.0
    %105 = vmatpush1.msra.mxu0 0.0
    %106 = vmatprep.subr.mxu0 0.0
    %107 = vmatpush1.msra.mxu0 0.0
    %108 = vmatprep.subr.mxu0 0.0
    %109 = vmatpush1.msra.mxu0 0.0
    %110 = vmatprep.subr.mxu0 0.0
    %111 = vmatpush1.msra.mxu0 0.0
    %112 = vmatprep.subr.mxu0 0.0
    %113 = vmatpush1.msra.mxu0 0.0
    %114 = vmatprep.subr.mxu0 0.0
    %115 = vmatpush1.msra.mxu0 0.0
    %116 = vmatprep.subr.mxu0 0.0
    %117 = vmatpush1.msra.mxu0 0.0
    %118 = vmatprep.subr.mxu0 0.0
    %119 = vmatpush1.msra.mxu0 0.0
    %120 = vmatprep.subr.mxu0 0.0
    %121 = vmatpush1.msra.mxu0 0.0
    %122 = vmatprep.subr.mxu0 0.0
    %123 = vmatpush1.msra.mxu0 0.0
    %124 = vmatprep.subr.mxu0 0.0
    %125 = vmatpush1.msra.mxu0 0.0
    %126 = vmatprep.subr.mxu0 0.0
    %127 = vmatpush1.msra.mxu0 0.0
    %128 = vmatprep.subr.mxu0 0.0
    %129 = vmatpush1.msra.mxu0 0.0
    %130 = vmatprep.subr.mxu0 0.0
    %131 = vmatpush1.msra.mxu0 0.0
    %132 = vmatprep.subr.mxu0 0.0
    %133 = vmatpush1.msra.mxu0 0.0
    %134 = vmatprep.subr.mxu0 0.0
    %135 = vmatpush1.msra.mxu0 0.0
    %136 = vmatprep.subr.mxu0 0.0
    %137 = vmatpush1.msra.mxu0 0.0
    %138 = vmatprep.subr.mxu0 0.0
    %139 = vmatpush1.msra.mxu0 0.0
    %140 = vmatprep.subr.mxu0 0.0
    %141 = vmatpush1.msra.mxu0 0.0
    %142 = vmatprep.subr.mxu0 0.0
    %143 = vmatpush1.msra.mxu0 0.0
    %144 = vmatprep.subr.mxu0 0.0
    %145 = vmatpush1.msra.mxu0 0.0
    %146 = vmatprep.subr.mxu0 0.0
    %147 = vmatpush1.msra.mxu0 0.0
    %148 = vmatprep.subr.mxu0 0.0
    %149 = vmatpush1.msra.mxu0 0.0
    %150 = vmatprep.subr.mxu0 0.0
    %151 = vmatpush1.msra.mxu0 0.0
    %152 = vmatprep.subr.mxu0 0.0
    %153 = vmatpush1.msra.mxu0 0.0
    %154 = vmatprep.subr.mxu0 0.0
    %155 = vmatpush1.msra.mxu0 0.0
    %156 = vmatprep.subr.mxu0 0.0
    %157 = vmatpush1.msra.mxu0 0.0
    %158 = vmatprep.subr.mxu0 0.0
    %159 = vmatpush1.msra.mxu0 0.0
    %160 = vmatprep.subr.mxu0 0.0
    %161 = vmatpush1.msra.mxu0 0.0
    %162 = vmatprep.mubr.f32.mxu0 0.0
    %163 = vmatmul.mubr.f32.gmra.mrb[0].mxu0 %v93
    %v164 = vpop.f32.mrb[0].mxu0
    %v165 = vadd.f32 0.0, %v164
    %v166 = vpop.f32.mrb[0].mxu0
    %167 = vmatprep.mubr.f32.mxu0 0.0
    %168 = vmatmul.mubr.f32.gmra.mrb[0].mxu0 %v96
    %v169 = vpop.f32.mrb[0].mxu0
    %v170 = vadd.f32 0.0, %v169
    %v171 = vpop.f32.mrb[0].mxu0
    %172 = vdwg.mxu0
    %v173 = vadd.f32 %v85, %v165
    %v174 = vadd.f32 %v86, %v170
    %175 = vst [vmem:[#allocation2] sm:$0xff] %v173
    %176 = vst [vmem:[#allocation2 + $0x8] sm:$0xff] %v174
    // Predicated region
    $region46: #{tpu_custom_call.1} parent=1 // pred_check
      %p177 = pneg %p79
    $region47: #{tpu_custom_call.1} parent=1 // pred_check_branch
      %179 = sbr.rel (%p177) target = $region49
    $region48: #{tpu_custom_call.1} parent=1 // pred_region
      %v180 = vld [vmem:[#allocation2] sm:$0xff]
      %v181 = vld [vmem:[#allocation2 + $0x8] sm:$0xff]
      %v182 = vld [vmem:[#allocation8] sm:$0xff]
      %v183 = vld [vmem:[#allocation8 + $0x8] sm:$0xff]
      %v184 = vld [vmem:[#allocation8 + $0x10] sm:$0xff]
      %v185 = vld [vmem:[#allocation8 + $0x18] sm:$0xff]
      %v186 = vld [vmem:[#allocation8 + $0x20] sm:$0xff]
      %v187 = vld [vmem:[#allocation8 + $0x28] sm:$0xff]
      %v188 = vld [vmem:[#allocation8 + $0x30] sm:$0xff]
      %v189 = vld [vmem:[#allocation8 + $0x38] sm:$0xff]
      %v190 = vld [vmem:[#allocation8 + $0x40] sm:$0xff]
      %v191 = vld [vmem:[#allocation8 + $0x48] sm:$0xff]
      %v192 = vld [vmem:[#allocation8 + $0x50] sm:$0xff]
      %v193 = vld [vmem:[#allocation8 + $0x58] sm:$0xff]
      %v194 = vld [vmem:[#allocation8 + $0x60] sm:$0xff]
      %v195 = vld [vmem:[#allocation8 + $0x68] sm:$0xff]
      %v196 = vld [vmem:[#allocation8 + $0x70] sm:$0xff]
      %v197 = vld [vmem:[#allocation8 + $0x78] sm:$0xff]
      %v198 = vld [vmem:[%s3] sm:$0x1]
      %v200 = vlaneseq
      %v201 = vshrl.u32 %v200, 7
      %v202 = vsub.s32 0, %v201
      %v203 = vrot.slane %v198, %v202
      %205 = vmatprep.subr.mxu0 0.0
      %206 = vmatpush1.msra.mxu0 %v182
      %207 = vmatprep.subr.mxu0 0.0
      %208 = vmatpush1.msra.mxu0 %v183
      %209 = vmatprep.subr.mxu0 0.0
      %210 = vmatpush1.msra.mxu0 %v184
      %211 = vmatprep.subr.mxu0 0.0
      %212 = vmatpush1.msra.mxu0 %v185
      %213 = vmatprep.subr.mxu0 0.0
      %214 = vmatpush1.msra.mxu0 %v186
      %215 = vmatprep.subr.mxu0 0.0
      %216 = vmatpush1.msra.mxu0 %v187
      %217 = vmatprep.subr.mxu0 0.0
      %218 = vmatpush1.msra.mxu0 %v188
      %219 = vmatprep.subr.mxu0 0.0
      %220 = vmatpush1.msra.mxu0 %v189
      %221 = vmatprep.subr.mxu0 0.0
      %222 = vmatpush1.msra.mxu0 %v190
      %223 = vmatprep.subr.mxu0 0.0
      %224 = vmatpush1.msra.mxu0 %v191
      %225 = vmatprep.subr.mxu0 0.0
      %226 = vmatpush1.msra.mxu0 %v192
      %227 = vmatprep.subr.mxu0 0.0
      %228 = vmatpush1.msra.mxu0 %v193
      %229 = vmatprep.subr.mxu0 0.0
      %230 = vmatpush1.msra.mxu0 %v194
      %231 = vmatprep.subr.mxu0 0.0
      %232 = vmatpush1.msra.mxu0 %v195
      %233 = vmatprep.subr.mxu0 0.0
      %234 = vmatpush1.msra.mxu0 %v196
      %235 = vmatprep.subr.mxu0 0.0
      %236 = vmatpush1.msra.mxu0 %v197
      %237 = vmatprep.subr.mxu0 0.0
      %238 = vmatpush1.msra.mxu0 0.0
      %239 = vmatprep.subr.mxu0 0.0
      %240 = vmatpush1.msra.mxu0 0.0
      %241 = vmatprep.subr.mxu0 0.0
      %242 = vmatpush1.msra.mxu0 0.0
      %243 = vmatprep.subr.mxu0 0.0
      %244 = vmatpush1.msra.mxu0 0.0
      %245 = vmatprep.subr.mxu0 0.0
      %246 = vmatpush1.msra.mxu0 0.0
      %247 = vmatprep.subr.mxu0 0.0
      %248 = vmatpush1.msra.mxu0 0.0
      %249 = vmatprep.subr.mxu0 0.0
      %250 = vmatpush1.msra.mxu0 0.0
      %251 = vmatprep.subr.mxu0 0.0
      %252 = vmatpush1.msra.mxu0 0.0
      %253 = vmatprep.subr.mxu0 0.0
      %254 = vmatpush1.msra.mxu0 0.0
      %255 = vmatprep.subr.mxu0 0.0
      %256 = vmatpush1.msra.mxu0 0.0
      %257 = vmatprep.subr.mxu0 0.0
      %258 = vmatpush1.msra.mxu0 0.0
      %259 = vmatprep.subr.mxu0 0.0
      %260 = vmatpush1.msra.mxu0 0.0
      %261 = vmatprep.subr.mxu0 0.0
      %262 = vmatpush1.msra.mxu0 0.0
      %263 = vmatprep.subr.mxu0 0.0
      %264 = vmatpush1.msra.mxu0 0.0
      %265 = vmatprep.subr.mxu0 0.0
      %266 = vmatpush1.msra.mxu0 0.0
      %267 = vmatprep.subr.mxu0 0.0
      %268 = vmatpush1.msra.mxu0 0.0
      %269 = vmatprep.mubr.f32.mxu0 0.0
      %270 = vmatmul.mubr.f32.gmra.mrb[0].mxu0 %v180
      %v271 = vpop.f32.mrb[0].mxu0
      %v272 = vadd.f32 %v203, %v271
      %v273 = vpop.f32.mrb[0].mxu0
      %274 = vmatprep.mubr.f32.mxu0 0.0
      %275 = vmatmul.mubr.f32.gmra.mrb[0].mxu0 %v181
      %v276 = vpop.f32.mrb[0].mxu0
      %v277 = vadd.f32 %v203, %v276
      %v278 = vpop.f32.mrb[0].mxu0
      %279 = vdwg.mxu0
      %v280 = vmax.f32 %v272, 0.0
      %v281 = vmax.f32 %v277, 0.0
      %v282 = vld [vmem:[#allocation9] sm:$0xff]
      %v283 = vld [vmem:[#allocation9 + $0x8] sm:$0xff]
      %v284 = vld [vmem:[#allocation9 + $0x10] sm:$0xff]
      %v285 = vld [vmem:[#allocation9 + $0x18] sm:$0xff]
      %v286 = vld [vmem:[#allocation9 + $0x20] sm:$0xff]
      %v287 = vld [vmem:[#allocation9 + $0x28] sm:$0xff]
      %v288 = vld [vmem:[#allocation9 + $0x30] sm:$0xff]
      %v289 = vld [vmem:[#allocation9 + $0x38] sm:$0xff]
      %v290 = vld [vmem:[#allocation9 + $0x40] sm:$0xff]
      %v291 = vld [vmem:[#allocation9 + $0x48] sm:$0xff]
      %v292 = vld [vmem:[#allocation9 + $0x50] sm:$0xff]
      %v293 = vld [vmem:[#allocation9 + $0x58] sm:$0xff]
      %v294 = vld [vmem:[#allocation9 + $0x60] sm:$0xff]
      %v295 = vld [vmem:[#allocation9 + $0x68] sm:$0xff]
      %v296 = vld [vmem:[#allocation9 + $0x70] sm:$0xff]
      %v297 = vld [vmem:[#allocation9 + $0x78] sm:$0xff]
      %v298 = vld [vmem:[%s5] sm:$0x1]
      %v300 = vlaneseq
      %v301 = vshrl.u32 %v300, 7
      %v302 = vsub.s32 0, %v301
      %v303 = vrot.slane %v298, %v302
      %305 = vmatprep.subr.mxu0 0.0
      %306 = vmatpush1.msra.mxu0 %v282
      %307 = vmatprep.subr.mxu0 0.0
      %308 = vmatpush1.msra.mxu0 %v283
      %309 = vmatprep.subr.mxu0 0.0
      %310 = vmatpush1.msra.mxu0 %v284
      %311 = vmatprep.subr.mxu0 0.0
      %312 = vmatpush1.msra.mxu0 %v285
      %313 = vmatprep.subr.mxu0 0.0
      %314 = vmatpush1.msra.mxu0 %v286
      %315 = vmatprep.subr.mxu0 0.0
      %316 = vmatpush1.msra.mxu0 %v287
      %317 = vmatprep.subr.mxu0 0.0
      %318 = vmatpush1.msra.mxu0 %v288
      %319 = vmatprep.subr.mxu0 0.0
      %320 = vmatpush1.msra.mxu0 %v289
      %321 = vmatprep.subr.mxu0 0.0
      %322 = vmatpush1.msra.mxu0 %v290
      %323 = vmatprep.subr.mxu0 0.0
      %324 = vmatpush1.msra.mxu0 %v291
      %325 = vmatprep.subr.mxu0 0.0
      %326 = vmatpush1.msra.mxu0 %v292
      %327 = vmatprep.subr.mxu0 0.0
      %328 = vmatpush1.msra.mxu0 %v293
      %329 = vmatprep.subr.mxu0 0.0
      %330 = vmatpush1.msra.mxu0 %v294
      %331 = vmatprep.subr.mxu0 0.0
      %332 = vmatpush1.msra.mxu0 %v295
      %333 = vmatprep.subr.mxu0 0.0
      %334 = vmatpush1.msra.mxu0 %v296
      %335 = vmatprep.subr.mxu0 0.0
      %336 = vmatpush1.msra.mxu0 %v297
      %337 = vmatprep.subr.mxu0 0.0
      %338 = vmatpush1.msra.mxu0 0.0
      %339 = vmatprep.subr.mxu0 0.0
      %340 = vmatpush1.msra.mxu0 0.0
      %341 = vmatprep.subr.mxu0 0.0
      %342 = vmatpush1.msra.mxu0 0.0
      %343 = vmatprep.subr.mxu0 0.0
      %344 = vmatpush1.msra.mxu0 0.0
      %345 = vmatprep.subr.mxu0 0.0
      %346 = vmatpush1.msra.mxu0 0.0
      %347 = vmatprep.subr.mxu0 0.0
      %348 = vmatpush1.msra.mxu0 0.0
      %349 = vmatprep.subr.mxu0 0.0
      %350 = vmatpush1.msra.mxu0 0.0
      %351 = vmatprep.subr.mxu0 0.0
      %352 = vmatpush1.msra.mxu0 0.0
      %353 = vmatprep.subr.mxu0 0.0
      %354 = vmatpush1.msra.mxu0 0.0
      %355 = vmatprep.subr.mxu0 0.0
      %356 = vmatpush1.msra.mxu0 0.0
      %357 = vmatprep.subr.mxu0 0.0
      %358 = vmatpush1.msra.mxu0 0.0
      %359 = vmatprep.subr.mxu0 0.0
      %360 = vmatpush1.msra.mxu0 0.0
      %361 = vmatprep.subr.mxu0 0.0
      %362 = vmatpush1.msra.mxu0 0.0
      %363 = vmatprep.subr.mxu0 0.0
      %364 = vmatpush1.msra.mxu0 0.0
      %365 = vmatprep.subr.mxu0 0.0
      %366 = vmatpush1.msra.mxu0 0.0
      %367 = vmatprep.subr.mxu0 0.0
      %368 = vmatpush1.msra.mxu0 0.0
      %369 = vmatprep.mubr.f32.mxu0 0.0
      %370 = vmatmul.mubr.f32.gmra.mrb[0].mxu0 %v280
      %v371 = vpop.f32.mrb[0].mxu0
      %v372 = vadd.f32 %v303, %v371
      %v373 = vpop.f32.mrb[0].mxu0
      %374 = vmatprep.mubr.f32.mxu0 0.0
      %375 = vmatmul.mubr.f32.gmra.mrb[0].mxu0 %v281
      %v376 = vpop.f32.mrb[0].mxu0
      %v377 = vadd.f32 %v303, %v376
      %v378 = vpop.f32.mrb[0].mxu0
      %379 = vdwg.mxu0
      %380 = vst [vmem:[#allocation11] sm:$0xff] %v372
      %381 = vst [vmem:[#allocation11 + $0x8] sm:$0xff] %v377
    $region49: #{tpu_custom_call.1} parent=1 // pred_fallthru
      _
    // Predicated region
    $region50: #{tpu_custom_call.1} parent=1 // pred_check
      _
    $region51: #{tpu_custom_call.1} parent=1 // pred_check_branch
      %383 = sbr.rel (0) target = $region53
    $region52: #{tpu_custom_call.1} parent=1 // pred_region
      %s385 = ssub.s32 256, 256
      %386 = vsyncadd [#allocation5], %s385
      %s387 = sshll.u32 [#allocation11], 4
      %s388 = int_to_ptr.vmem [resolvable:$true] %s387
      %393 = dma.vmem_to_hbm [thread:$0]  %s388, 256, %s6, [#allocation5], 128, 128, 8
    $region53: #{tpu_custom_call.1} parent=1 // pred_fallthru
      _
    // Predicated region
    $region54: #{tpu_custom_call.1} parent=1 // pred_check
      _
    $region55: #{tpu_custom_call.1} parent=1 // pred_check_branch
      %395 = sbr.rel (0) target = $region57
    $region56: #{tpu_custom_call.1} parent=1 // pred_region
      %396 = dma.done [#allocation5], 256
    $region57: #{tpu_custom_call.1} parent=1 // pred_fallthru
      _
    %397 = vsyncpa [#allocation4], 1
    %398 = vsyncpa [#allocation7], 1
    %399 = vsyncpa [#allocation10], 1
    %400 = vsyncpa [#allocation5], 1

</llo_original>
